<compile_context>
chip_gen: v7x
topology: tpu7x:2x2x1
jax: 0.10.0
libtpu: 0.0.40
codegen_flags: <defaults>
</compile_context>

<pallas_src>
import jax
import jax.numpy as jnp
from jax.experimental import pallas as pl
from jax.experimental.pallas import tpu as pltpu


def _round_up(x: int, m: int) -> int:
    return (x + m - 1) // m * m


def _cdiv(a: int, b: int) -> int:
    return (a + b - 1) // b


def mlp_kernel(x_ref, w1_ref, b1_ref, w2_ref, b2_ref, w3_ref, o_ref):
    # fc1 + ReLU : (bm, S) @ (S, H1) -> (bm, H1)
    h1 = jnp.dot(x_ref[...], w1_ref[...], preferred_element_type=jnp.float32)
    h1 = jnp.maximum(h1 + b1_ref[...], 0.0)
    # fc2 + LeakyReLU (negative_slope=0.01, PyTorch default) : (bm, H1) @ (H1, H2P)
    # Padded hidden columns: W2 cols zero; b2p carrier col == 1 -> h2 carrier col == 1,
    # remaining padded cols stay exactly 0 (LeakyReLU(0) == 0).
    z2 = jnp.dot(h1, w2_ref[...], preferred_element_type=jnp.float32) + b2_ref[...]
    h2 = jnp.where(z2 > 0, z2, 0.01 * z2)
    # fc3 with the batch landing on output lanes: (1, H2P) @ (H2P, bm) -> (1, bm).
    # w3_row's carrier entry holds b3, so the bias is added by the matmul itself.
    o_ref[...] = jnp.dot(w3_ref[...], h2.T,
                         preferred_element_type=jnp.float32).astype(o_ref.dtype)


def prepare_params(w1, b1, w2, b2, w3, b3):
    """One-time parameter prep (pad 100 -> 128 hidden cols, fold fc3 bias). Exact."""
    n_hidden, h2_dim = w2.shape
    assert w3.shape == (h2_dim, 1), "fc3 must map to a single output (per the module)"
    # Reserve at least one spare padded column to carry the fc3 bias.
    H2P = _round_up(h2_dim + 1, 128)
    b1r = b1.reshape(1, -1)
    w2p = jnp.pad(w2, ((0, 0), (0, H2P - h2_dim)))
    b2p = jnp.pad(b2.reshape(1, -1), ((0, 0), (0, H2P - h2_dim)))
    b2p = b2p.at[0, h2_dim].set(1.0)              # carrier column -> h2[:, h2_dim] == 1
    w3r = jnp.pad(w3.reshape(1, -1), ((0, 0), (0, H2P - h2_dim)))
    w3r = w3r.at[0, h2_dim].set(b3[0])            # fc3 bias folded into the matmul
    return (w1, b1r, w2p, b2p, w3r)


def mlp_forward(x, params, *, bm=1024):
    w1, b1r, w2p, b2p, w3r = params
    B, n_states = x.shape
    n_hidden = w1.shape[1]
    H2P = w2p.shape[1]

    # --- batch tiling: balanced tiles, >=2 grid steps when worthwhile (v7x 2 TCs) ---
    num_tiles = max(_cdiv(B, bm), 2 if B >= 512 else 1)
    if num_tiles == 1:
        bm_eff = _round_up(B, 8)                  # minimal padding for small batches
    else:
        # multiple of 128 so every (1, bm_eff) output block is an unmasked lane store
        bm_eff = _round_up(_cdiv(B, num_tiles), 128)
    B_pad = num_tiles * bm_eff
    if B_pad != B:
        x = jnp.pad(x, ((0, B_pad - B), (0, 0)))

    flops = 2 * B_pad * (n_states * n_hidden + n_hidden * H2P + H2P)
    bytes_accessed = 4 * (B_pad * n_states + w1.size + b1r.size + w2p.size
                          + b2p.size + w3r.size + B_pad)

    out_row = pl.pallas_call(
        mlp_kernel,
        out_shape=jax.ShapeDtypeStruct((1, B_pad), jnp.float32),
        grid_spec=pltpu.PrefetchScalarGridSpec(
            num_scalar_prefetch=0,
            grid=(num_tiles,),
            in_specs=[
                pl.BlockSpec((bm_eff, n_states), lambda i: (i, 0)),    # x tile
                pl.BlockSpec((n_states, n_hidden), lambda i: (0, 0)),  # W1
                pl.BlockSpec((1, n_hidden), lambda i: (0, 0)),         # b1
                pl.BlockSpec((n_hidden, H2P), lambda i: (0, 0)),       # W2 (padded)
                pl.BlockSpec((1, H2P), lambda i: (0, 0)),              # b2 (padded, carrier)
                pl.BlockSpec((1, H2P), lambda i: (0, 0)),              # W3 row (padded, +b3)
            ],
            out_specs=pl.BlockSpec((1, bm_eff), lambda i: (0, i)),     # lane-dense batch row
        ),
        compiler_params=pltpu.CompilerParams(
            dimension_semantics=("parallel",)),
        cost_estimate=pl.CostEstimate(flops=flops, transcendentals=0,
                                      bytes_accessed=bytes_accessed),
    )(x, w1, b1r, w2p, b2p, w3r)

    # Drop lane padding and restore the (B, 1) column shape of the module output.
    return out_row[0, :B].reshape(B, 1)


def reference_forward(x, w1, b1, w2, b2, w3, b3):
    h1 = jnp.maximum(x @ w1 + b1, 0.0)
    z2 = h1 @ w2 + b2
    h2 = jnp.where(z2 > 0, z2, 0.01 * z2)
    return h2 @ w3 + b3


if __name__ == "__main__":
    # Small shapes consistent with the module: MDP.n_states=32, hidden 128 -> 100 -> 1.
    # batch=10 deliberately not a multiple of 8 to exercise the ragged-batch path.
    n_states, n_hidden, batch = 32, 128, 10

    key = jax.random.PRNGKey(0)
    ks = jax.random.split(key, 7)
    x = jax.random.normal(ks[0], (batch, n_states), dtype=jnp.float32)

    # Deterministic parameter init (uniform, PyTorch-Linear-like scale).
    def init_linear(kw, kb, fan_in, fan_out):
        bound = 1.0 / (fan_in ** 0.5)
        w = jax.random.uniform(kw, (fan_in, fan_out), jnp.float32, -bound, bound)
        b = jax.random.uniform(kb, (fan_out,), jnp.float32, -bound, bound)
        return w, b

    w1, b1 = init_linear(ks[1], ks[2], n_states, n_hidden)
    w2, b2 = init_linear(ks[3], ks[4], n_hidden, 100)
    w3, b3 = init_linear(ks[5], ks[6], 100, 1)

    params = prepare_params(w1, b1, w2, b2, w3, b3)   # one-time prep, hoisted

    out = jax.block_until_ready(mlp_forward(x, params))
    ref = reference_forward(x, w1, b1, w2, b2, w3, b3)
    assert out.shape == (batch, 1)
    assert jnp.allclose(out, ref, atol=1e-5, rtol=1e-5)

    # Also exercise the multi-tile (lane-dense, 128-row-aligned) path.
    batch2 = 272
    x2 = jax.random.normal(jax.random.PRNGKey(1), (batch2, n_states), dtype=jnp.float32)
    out2 = jax.block_until_ready(mlp_forward(x2, params, bm=128))
    ref2 = reference_forward(x2, w1, b1, w2, b2, w3, b3)
    assert out2.shape == (batch2, 1)
    assert jnp.allclose(out2, ref2, atol=1e-5, rtol=1e-5)

    print("KERNEL_OK")
</pallas_src>

<mosaic_0001>
module attributes {stable_mosaic.version = 11 : i64} {
  func.func @mlp_kernel(%arg0: i32, %arg1: memref<16x32xf32, #tpu.memory_space<vmem>>, %arg2: memref<32x128xf32, #tpu.memory_space<vmem>>, %arg3: memref<1x128xf32, #tpu.memory_space<vmem>>, %arg4: memref<128x128xf32, #tpu.memory_space<vmem>>, %arg5: memref<1x128xf32, #tpu.memory_space<vmem>>, %arg6: memref<1x128xf32, #tpu.memory_space<vmem>>, %arg7: memref<1x16xf32, #tpu.memory_space<vmem>>) attributes {dimension_semantics = [#tpu.dimension_semantics<parallel>], iteration_bounds = array<i64: 1>, scalar_prefetch = 0 : i64, scratch_operands = 0 : i64, tpu.core_type = #tpu.core_type<tc>, window_params = [{transform_indices = @transform_0, window_bounds = array<i64: 16, 32>}, {pipeline_mode = #tpu.pipeline_mode<synchronous>, transform_indices = @transform_1, window_bounds = array<i64: 32, 128>}, {pipeline_mode = #tpu.pipeline_mode<synchronous>, transform_indices = @transform_2, window_bounds = array<i64: 1, 128>}, {pipeline_mode = #tpu.pipeline_mode<synchronous>, transform_indices = @transform_3, window_bounds = array<i64: 128, 128>}, {pipeline_mode = #tpu.pipeline_mode<synchronous>, transform_indices = @transform_4, window_bounds = array<i64: 1, 128>}, {pipeline_mode = #tpu.pipeline_mode<synchronous>, transform_indices = @transform_5, window_bounds = array<i64: 1, 128>}, {transform_indices = @transform_6, window_bounds = array<i64: 1, 16>}]} {
    %c0 = arith.constant 0 : index
    %c0_0 = arith.constant 0 : index
    %0 = vector.load %arg1[%c0, %c0_0] : memref<16x32xf32, #tpu.memory_space<vmem>>, vector<16x32xf32>
    %c0_1 = arith.constant 0 : index
    %c0_2 = arith.constant 0 : index
    %1 = vector.load %arg2[%c0_1, %c0_2] : memref<32x128xf32, #tpu.memory_space<vmem>>, vector<32x128xf32>
    %cst = arith.constant dense<0.000000e+00> : vector<16x128xf32>
    %2 = tpu.matmul %0, %1, %cst {dimension_numbers = #tpu.dot_dimension_numbers<[1], [0], [0], [1], [0, 0, 1, 1], [], []>} : vector<16x32xf32>, vector<32x128xf32>, vector<16x128xf32> -> vector<16x128xf32>
    %c0_3 = arith.constant 0 : index
    %c0_4 = arith.constant 0 : index
    %3 = vector.load %arg3[%c0_3, %c0_4] : memref<1x128xf32, #tpu.memory_space<vmem>>, vector<1x128xf32>
    %4 = vector.broadcast %3 : vector<1x128xf32> to vector<16x128xf32>
    %5 = arith.addf %2, %4 : vector<16x128xf32>
    %cst_5 = arith.constant 0.000000e+00 : f32
    %6 = vector.broadcast %cst_5 : f32 to vector<16x128xf32>
    %7 = arith.maximumf %5, %6 : vector<16x128xf32>
    %c0_6 = arith.constant 0 : index
    %c0_7 = arith.constant 0 : index
    %8 = vector.load %arg4[%c0_6, %c0_7] : memref<128x128xf32, #tpu.memory_space<vmem>>, vector<128x128xf32>
    %cst_8 = arith.constant dense<0.000000e+00> : vector<16x128xf32>
    %9 = tpu.matmul %7, %8, %cst_8 {dimension_numbers = #tpu.dot_dimension_numbers<[1], [0], [0], [1], [0, 0, 1, 1], [], []>} : vector<16x128xf32>, vector<128x128xf32>, vector<16x128xf32> -> vector<16x128xf32>
    %c0_9 = arith.constant 0 : index
    %c0_10 = arith.constant 0 : index
    %10 = vector.load %arg5[%c0_9, %c0_10] : memref<1x128xf32, #tpu.memory_space<vmem>>, vector<1x128xf32>
    %11 = vector.broadcast %10 : vector<1x128xf32> to vector<16x128xf32>
    %12 = arith.addf %9, %11 : vector<16x128xf32>
    %cst_11 = arith.constant 0.000000e+00 : f32
    %13 = vector.broadcast %cst_11 : f32 to vector<16x128xf32>
    %14 = arith.cmpf ogt, %12, %13 : vector<16x128xf32>
    %cst_12 = arith.constant 0.00999999977 : f32
    %15 = vector.broadcast %cst_12 : f32 to vector<16x128xf32>
    %16 = arith.mulf %15, %12 : vector<16x128xf32>
    %17 = arith.select %14, %12, %16 : vector<16x128xi1>, vector<16x128xf32>
    %c0_13 = arith.constant 0 : index
    %c0_14 = arith.constant 0 : index
    %18 = vector.load %arg6[%c0_13, %c0_14] : memref<1x128xf32, #tpu.memory_space<vmem>>, vector<1x128xf32>
    %19 = tpu.transpose %17, [1, 0] : vector<16x128xf32> -> vector<128x16xf32>
    %cst_15 = arith.constant dense<0.000000e+00> : vector<1x16xf32>
    %20 = tpu.matmul %18, %19, %cst_15 {dimension_numbers = #tpu.dot_dimension_numbers<[1], [0], [0], [1], [0, 0, 1, 1], [], []>} : vector<1x128xf32>, vector<128x16xf32>, vector<1x16xf32> -> vector<1x16xf32>
    %c0_16 = arith.constant 0 : index
    %c0_17 = arith.constant 0 : index
    %21 = vector.load %arg7[%c0_16, %c0_17] : memref<1x16xf32, #tpu.memory_space<vmem>>, vector<1x16xf32>
    tpu.vector_store %arg7[%c0_16, %c0_17], %20 {strides = array<i32>} : memref<1x16xf32, #tpu.memory_space<vmem>>, vector<1x16xf32>,
    return
  }
  func.func @transform_0(%arg0: i32) -> (i32, i32) {
    %c0_i32 = arith.constant 0 : i32
    %c0_i32_0 = arith.constant 0 : i32
    return %arg0, %c0_i32 : i32, i32
  }
  func.func @transform_1(%arg0: i32) -> (i32, i32) {
    %c0_i32 = arith.constant 0 : i32
    %c0_i32_0 = arith.constant 0 : i32
    %c0_i32_1 = arith.constant 0 : i32
    return %c0_i32, %c0_i32_0 : i32, i32
  }
  func.func @transform_2(%arg0: i32) -> (i32, i32) {
    %c0_i32 = arith.constant 0 : i32
    %c0_i32_0 = arith.constant 0 : i32
    %c0_i32_1 = arith.constant 0 : i32
    return %c0_i32, %c0_i32_0 : i32, i32
  }
  func.func @transform_3(%arg0: i32) -> (i32, i32) {
    %c0_i32 = arith.constant 0 : i32
    %c0_i32_0 = arith.constant 0 : i32
    %c0_i32_1 = arith.constant 0 : i32
    return %c0_i32, %c0_i32_0 : i32, i32
  }
  func.func @transform_4(%arg0: i32) -> (i32, i32) {
    %c0_i32 = arith.constant 0 : i32
    %c0_i32_0 = arith.constant 0 : i32
    %c0_i32_1 = arith.constant 0 : i32
    return %c0_i32, %c0_i32_0 : i32, i32
  }
  func.func @transform_5(%arg0: i32) -> (i32, i32) {
    %c0_i32 = arith.constant 0 : i32
    %c0_i32_0 = arith.constant 0 : i32
    %c0_i32_1 = arith.constant 0 : i32
    return %c0_i32, %c0_i32_0 : i32, i32
  }
  func.func @transform_6(%arg0: i32) -> (i32, i32) {
    %c0_i32 = arith.constant 0 : i32
    %c0_i32_0 = arith.constant 0 : i32
    return %c0_i32, %arg0 : i32, i32
  }
}

</mosaic_0001>

<llo_original>
// kernel: tpu_custom_call.1
$region0: #{tpu_custom_call.1}
  #allocation0 [shape = 'u32[]', space=smem, size = 0x4, offset = 0x4, fixed_abs, tag = 'smem constant byte address 0x4 - core index']
  #allocation1 [shape = 'u32[144,128]{1,0:T(1,128)}', space=vmem, size = 0x12000, scoped, tag = 'internal scratch']
  %s0 = inlined_call_operand.hbm [shape: f32[16,32], index: 0, kind: input, shape index: {}]
  %s1 = inlined_call_operand.hbm [shape: f32[32,128], index: 1, kind: input, shape index: {}]
  %s2 = inlined_call_operand.vmem [shape: f32[1,128], index: 2, kind: input, shape index: {}]
  %s3 = inlined_call_operand.hbm [shape: f32[128,128], index: 3, kind: input, shape index: {}]
  %s4 = inlined_call_operand.vmem [shape: f32[1,128], index: 4, kind: input, shape index: {}]
  %s5 = inlined_call_operand.vmem [shape: f32[1,128], index: 5, kind: input, shape index: {}]
  %s6 = inlined_call_operand.hbm [shape: f32[1,16], index: 6, kind: output, shape index: {}]
  %s7 = sld [smem:[#allocation0]]
  $region46: #{tpu_custom_call.1} parent=0
    _
  %s9 = ssub.s32 1, %s7
  %s10 = scalar_select 0, %s9, %s7
  $region1: #{tpu_custom_call.1} parent=0
    #allocation2 [shape = 'u8[8192]{0}', space=vmem, size = 0x2000, scoped, tag = 'input window, operand 0, single buffered']
    #allocation3 [shape = 's32[1]{0}', space=sflag, size = 0x4, scoped, tag = 'scoped memory for tpu_custom_call.1']
    #allocation4 [shape = 's32[1]{0}', space=sflag, size = 0x4, scoped, tag = 'scoped memory for tpu_custom_call.1']
    #allocation5 [shape = 'u8[16384]{0}', space=vmem, size = 0x4000, scoped, tag = 'input window, operand 1, single buffered']
    #allocation6 [shape = 's32[1]{0}', space=sflag, size = 0x4, scoped, tag = 'scoped memory for tpu_custom_call.1']
    #allocation7 [shape = 'u8[65536]{0}', space=vmem, size = 0x10000, scoped, tag = 'input window, operand 3, single buffered']
    #allocation8 [shape = 'u8[512]{0}', space=vmem, size = 0x400, scoped, tag = 'output window, operand 0, single buffered']
    %11 = vsyncpa [#allocation3], 0
    %12 = vsyncpa [#allocation6], 0
    %13 = vsyncpa [#allocation4], 0
    // Predicated region
    $region2: #{tpu_custom_call.1} parent=1 // pred_check
      _
    $region3: #{tpu_custom_call.1} parent=1 // pred_check_branch
      %15 = sbr.rel (0) target = $region5
    $region4: #{tpu_custom_call.1} parent=1 // pred_region
      %s17 = ssub.s32 256, 256
      %18 = vsyncadd [#allocation3], %s17
      %s19 = sshll.u32 [#allocation2], 4
      %s20 = int_to_ptr.vmem [resolvable:$true] %s19
      %25 = dma.hbm_to_vmem [thread:$0]  %s0, 256, %s20, [#allocation3], 128, 128, 8
    $region5: #{tpu_custom_call.1} parent=1 // pred_fallthru
      _
    // Predicated region
    $region6: #{tpu_custom_call.1} parent=1 // pred_check
      _
    $region7: #{tpu_custom_call.1} parent=1 // pred_check_branch
      %27 = sbr.rel (0) target = $region9
    $region8: #{tpu_custom_call.1} parent=1 // pred_region
      %s29 = ssub.s32 512, 512
      %30 = vsyncadd [#allocation6], %s29
      %s31 = sshll.u32 [#allocation5], 4
      %s32 = int_to_ptr.vmem [resolvable:$true] %s31
      %37 = dma.hbm_to_vmem [thread:$0]  %s1, 512, %s32, [#allocation6], 128, 128, 8
    $region9: #{tpu_custom_call.1} parent=1 // pred_fallthru
      _
    // Predicated region
    $region10: #{tpu_custom_call.1} parent=1 // pred_check
      _
    $region11: #{tpu_custom_call.1} parent=1 // pred_check_branch
      %39 = sbr.rel (0) target = $region13
    $region12: #{tpu_custom_call.1} parent=1 // pred_region
      _
    $region13: #{tpu_custom_call.1} parent=1 // pred_fallthru
      _
    // Predicated region
    $region14: #{tpu_custom_call.1} parent=1 // pred_check
      _
    $region15: #{tpu_custom_call.1} parent=1 // pred_check_branch
      %41 = sbr.rel (0) target = $region17
    $region16: #{tpu_custom_call.1} parent=1 // pred_region
      %s43 = ssub.s32 2048, 2048
      %44 = vsyncadd [#allocation6], %s43
      %s45 = sshll.u32 [#allocation7], 4
      %s46 = int_to_ptr.vmem [resolvable:$true] %s45
      %51 = dma.hbm_to_vmem [thread:$0]  %s3, 2048, %s46, [#allocation6], 128, 128, 8
    $region17: #{tpu_custom_call.1} parent=1 // pred_fallthru
      _
    // Predicated region
    $region18: #{tpu_custom_call.1} parent=1 // pred_check
      _
    $region19: #{tpu_custom_call.1} parent=1 // pred_check_branch
      %53 = sbr.rel (0) target = $region21
    $region20: #{tpu_custom_call.1} parent=1 // pred_region
      _
    $region21: #{tpu_custom_call.1} parent=1 // pred_fallthru
      _
    // Predicated region
    $region22: #{tpu_custom_call.1} parent=1 // pred_check
      _
    $region23: #{tpu_custom_call.1} parent=1 // pred_check_branch
      %55 = sbr.rel (0) target = $region25
    $region24: #{tpu_custom_call.1} parent=1 // pred_region
      _
    $region25: #{tpu_custom_call.1} parent=1 // pred_fallthru
      _
    // Predicated region
    $region26: #{tpu_custom_call.1} parent=1 // pred_check
      _
    $region27: #{tpu_custom_call.1} parent=1 // pred_check_branch
      %57 = sbr.rel (0) target = $region29
    $region28: #{tpu_custom_call.1} parent=1 // pred_region
      %58 = dma.done [#allocation3], 256
    $region29: #{tpu_custom_call.1} parent=1 // pred_fallthru
      _
    // Predicated region
    $region30: #{tpu_custom_call.1} parent=1 // pred_check
      _
    $region31: #{tpu_custom_call.1} parent=1 // pred_check_branch
      %60 = sbr.rel (0) target = $region33
    $region32: #{tpu_custom_call.1} parent=1 // pred_region
      %61 = dma.done [#allocation6], 512
    $region33: #{tpu_custom_call.1} parent=1 // pred_fallthru
      _
    // Predicated region
    $region34: #{tpu_custom_call.1} parent=1 // pred_check
      _
    $region35: #{tpu_custom_call.1} parent=1 // pred_check_branch
      %63 = sbr.rel (0) target = $region37
    $region36: #{tpu_custom_call.1} parent=1 // pred_region
      %64 = dma.done [#allocation6], 2048
    $region37: #{tpu_custom_call.1} parent=1 // pred_fallthru
      _
    %v65 = vld [vmem:[#allocation2] sm:$0xff]
    %v66 = vld [vmem:[#allocation2 + $0x8] sm:$0xff]
    %v67 = vld [vmem:[#allocation5] sm:$0xff]
    %v68 = vld [vmem:[#allocation5 + $0x8] sm:$0xff]
    %v69 = vld [vmem:[#allocation5 + $0x10] sm:$0xff]
    %v70 = vld [vmem:[#allocation5 + $0x18] sm:$0xff]
    %v71 = vld [vmem:[%s2] sm:$0x1]
    %v73 = vlaneseq
    %v74 = vshrl.u32 %v73, 7
    %v75 = vsub.s32 0, %v74
    %v76 = vrot.slane %v71, %v75
    %vm78 = vcmask 261120
    %v80 = vsel %vm78, %v65, 0
    %v83 = vsel %vm78, %v66, 0
    %85 = vmatprep.subr.mxu0 0.0
    %86 = vmatpush1.msra.mxu0 %v67
    %87 = vmatprep.subr.mxu0 0.0
    %88 = vmatpush1.msra.mxu0 %v68
    %89 = vmatprep.subr.mxu0 0.0
    %90 = vmatpush1.msra.mxu0 %v69
    %91 = vmatprep.subr.mxu0 0.0
    %92 = vmatpush1.msra.mxu0 %v70
    %93 = vmatprep.subr.mxu0 0.0
    %94 = vmatpush1.msra.mxu0 0.0
    %95 = vmatprep.subr.mxu0 0.0
    %96 = vmatpush1.msra.mxu0 0.0
    %97 = vmatprep.subr.mxu0 0.0
    %98 = vmatpush1.msra.mxu0 0.0
    %99 = vmatprep.subr.mxu0 0.0
    %100 = vmatpush1.msra.mxu0 0.0
    %101 = vmatprep.subr.mxu0 0.0
    %102 = vmatpush1.msra.mxu0 0.0
    %103 = vmatprep.subr.mxu0 0.0
    %104 = vmatpush1.msra.mxu0 0.0
    %105 = vmatprep.subr.mxu0 0.0
    %106 = vmatpush1.msra.mxu0 0.0
    %107 = vmatprep.subr.mxu0 0.0
    %108 = vmatpush1.msra.mxu0 0.0
    %109 = vmatprep.subr.mxu0 0.0
    %110 = vmatpush1.msra.mxu0 0.0
    %111 = vmatprep.subr.mxu0 0.0
    %112 = vmatpush1.msra.mxu0 0.0
    %113 = vmatprep.subr.mxu0 0.0
    %114 = vmatpush1.msra.mxu0 0.0
    %115 = vmatprep.subr.mxu0 0.0
    %116 = vmatpush1.msra.mxu0 0.0
    %117 = vmatprep.subr.mxu0 0.0
    %118 = vmatpush1.msra.mxu0 0.0
    %119 = vmatprep.subr.mxu0 0.0
    %120 = vmatpush1.msra.mxu0 0.0
    %121 = vmatprep.subr.mxu0 0.0
    %122 = vmatpush1.msra.mxu0 0.0
    %123 = vmatprep.subr.mxu0 0.0
    %124 = vmatpush1.msra.mxu0 0.0
    %125 = vmatprep.subr.mxu0 0.0
    %126 = vmatpush1.msra.mxu0 0.0
    %127 = vmatprep.subr.mxu0 0.0
    %128 = vmatpush1.msra.mxu0 0.0
    %129 = vmatprep.subr.mxu0 0.0
    %130 = vmatpush1.msra.mxu0 0.0
    %131 = vmatprep.subr.mxu0 0.0
    %132 = vmatpush1.msra.mxu0 0.0
    %133 = vmatprep.subr.mxu0 0.0
    %134 = vmatpush1.msra.mxu0 0.0
    %135 = vmatprep.subr.mxu0 0.0
    %136 = vmatpush1.msra.mxu0 0.0
    %137 = vmatprep.subr.mxu0 0.0
    %138 = vmatpush1.msra.mxu0 0.0
    %139 = vmatprep.subr.mxu0 0.0
    %140 = vmatpush1.msra.mxu0 0.0
    %141 = vmatprep.subr.mxu0 0.0
    %142 = vmatpush1.msra.mxu0 0.0
    %143 = vmatprep.subr.mxu0 0.0
    %144 = vmatpush1.msra.mxu0 0.0
    %145 = vmatprep.subr.mxu0 0.0
    %146 = vmatpush1.msra.mxu0 0.0
    %147 = vmatprep.subr.mxu0 0.0
    %148 = vmatpush1.msra.mxu0 0.0
    %149 = vmatprep.mubr.f32.mxu0 0.0
    %150 = vmatmul.mubr.f32.gmra.mrb[0].mxu0 %v80
    %v151 = vpop.f32.mrb[0].mxu0
    %v152 = vadd.f32 %v76, %v151
    %v153 = vpop.f32.mrb[0].mxu0
    %154 = vmatprep.mubr.f32.mxu0 0.0
    %155 = vmatmul.mubr.f32.gmra.mrb[0].mxu0 %v83
    %v156 = vpop.f32.mrb[0].mxu0
    %v157 = vadd.f32 %v76, %v156
    %v158 = vpop.f32.mrb[0].mxu0
    %159 = vdwg.mxu0
    %v160 = vmax.f32 %v152, 0.0
    %v161 = vmax.f32 %v157, 0.0
    %v162 = vld [vmem:[#allocation7] sm:$0xff]
    %v163 = vld [vmem:[#allocation7 + $0x8] sm:$0xff]
    %v164 = vld [vmem:[#allocation7 + $0x10] sm:$0xff]
    %v165 = vld [vmem:[#allocation7 + $0x18] sm:$0xff]
    %v166 = vld [vmem:[#allocation7 + $0x20] sm:$0xff]
    %v167 = vld [vmem:[#allocation7 + $0x28] sm:$0xff]
    %v168 = vld [vmem:[#allocation7 + $0x30] sm:$0xff]
    %v169 = vld [vmem:[#allocation7 + $0x38] sm:$0xff]
    %v170 = vld [vmem:[#allocation7 + $0x40] sm:$0xff]
    %v171 = vld [vmem:[#allocation7 + $0x48] sm:$0xff]
    %v172 = vld [vmem:[#allocation7 + $0x50] sm:$0xff]
    %v173 = vld [vmem:[#allocation7 + $0x58] sm:$0xff]
    %v174 = vld [vmem:[#allocation7 + $0x60] sm:$0xff]
    %v175 = vld [vmem:[#allocation7 + $0x68] sm:$0xff]
    %v176 = vld [vmem:[#allocation7 + $0x70] sm:$0xff]
    %v177 = vld [vmem:[#allocation7 + $0x78] sm:$0xff]
    %v178 = vld [vmem:[%s4] sm:$0x1]
    %v180 = vlaneseq
    %v181 = vshrl.u32 %v180, 7
    %v182 = vsub.s32 0, %v181
    %v183 = vrot.slane %v178, %v182
    %185 = vmatprep.subr.mxu0 0.0
    %186 = vmatpush1.msra.mxu0 %v162
    %187 = vmatprep.subr.mxu0 0.0
    %188 = vmatpush1.msra.mxu0 %v163
    %189 = vmatprep.subr.mxu0 0.0
    %190 = vmatpush1.msra.mxu0 %v164
    %191 = vmatprep.subr.mxu0 0.0
    %192 = vmatpush1.msra.mxu0 %v165
    %193 = vmatprep.subr.mxu0 0.0
    %194 = vmatpush1.msra.mxu0 %v166
    %195 = vmatprep.subr.mxu0 0.0
    %196 = vmatpush1.msra.mxu0 %v167
    %197 = vmatprep.subr.mxu0 0.0
    %198 = vmatpush1.msra.mxu0 %v168
    %199 = vmatprep.subr.mxu0 0.0
    %200 = vmatpush1.msra.mxu0 %v169
    %201 = vmatprep.subr.mxu0 0.0
    %202 = vmatpush1.msra.mxu0 %v170
    %203 = vmatprep.subr.mxu0 0.0
    %204 = vmatpush1.msra.mxu0 %v171
    %205 = vmatprep.subr.mxu0 0.0
    %206 = vmatpush1.msra.mxu0 %v172
    %207 = vmatprep.subr.mxu0 0.0
    %208 = vmatpush1.msra.mxu0 %v173
    %209 = vmatprep.subr.mxu0 0.0
    %210 = vmatpush1.msra.mxu0 %v174
    %211 = vmatprep.subr.mxu0 0.0
    %212 = vmatpush1.msra.mxu0 %v175
    %213 = vmatprep.subr.mxu0 0.0
    %214 = vmatpush1.msra.mxu0 %v176
    %215 = vmatprep.subr.mxu0 0.0
    %216 = vmatpush1.msra.mxu0 %v177
    %217 = vmatprep.subr.mxu0 0.0
    %218 = vmatpush1.msra.mxu0 0.0
    %219 = vmatprep.subr.mxu0 0.0
    %220 = vmatpush1.msra.mxu0 0.0
    %221 = vmatprep.subr.mxu0 0.0
    %222 = vmatpush1.msra.mxu0 0.0
    %223 = vmatprep.subr.mxu0 0.0
    %224 = vmatpush1.msra.mxu0 0.0
    %225 = vmatprep.subr.mxu0 0.0
    %226 = vmatpush1.msra.mxu0 0.0
    %227 = vmatprep.subr.mxu0 0.0
    %228 = vmatpush1.msra.mxu0 0.0
    %229 = vmatprep.subr.mxu0 0.0
    %230 = vmatpush1.msra.mxu0 0.0
    %231 = vmatprep.subr.mxu0 0.0
    %232 = vmatpush1.msra.mxu0 0.0
    %233 = vmatprep.subr.mxu0 0.0
    %234 = vmatpush1.msra.mxu0 0.0
    %235 = vmatprep.subr.mxu0 0.0
    %236 = vmatpush1.msra.mxu0 0.0
    %237 = vmatprep.subr.mxu0 0.0
    %238 = vmatpush1.msra.mxu0 0.0
    %239 = vmatprep.subr.mxu0 0.0
    %240 = vmatpush1.msra.mxu0 0.0
    %241 = vmatprep.subr.mxu0 0.0
    %242 = vmatpush1.msra.mxu0 0.0
    %243 = vmatprep.subr.mxu0 0.0
    %244 = vmatpush1.msra.mxu0 0.0
    %245 = vmatprep.subr.mxu0 0.0
    %246 = vmatpush1.msra.mxu0 0.0
    %247 = vmatprep.subr.mxu0 0.0
    %248 = vmatpush1.msra.mxu0 0.0
    %249 = vmatprep.mubr.f32.mxu0 0.0
    %250 = vmatmul.mubr.f32.gmra.mrb[0].mxu0 %v160
    %v251 = vpop.f32.mrb[0].mxu0
    %v252 = vadd.f32 %v183, %v251
    %v253 = vpop.f32.mrb[0].mxu0
    %254 = vmatprep.mubr.f32.mxu0 0.0
    %255 = vmatmul.mubr.f32.gmra.mrb[0].mxu0 %v161
    %v256 = vpop.f32.mrb[0].mxu0
    %v257 = vadd.f32 %v183, %v256
    %v258 = vpop.f32.mrb[0].mxu0
    %259 = vdwg.mxu0
    %vm260 = vcmp.gt.f32.partialorder %v252, 0.0
    %vm261 = vcmp.gt.f32.partialorder %v257, 0.0
    %v262 = vmul.f32 %v252, 0.01
    %v263 = vmul.f32 %v257, 0.01
    %v264 = vsel %vm260, %v252, %v262
    %v265 = vsel %vm261, %v257, %v263
    %v266 = vld [vmem:[%s5] sm:$0x1]
    %267 = vmatprep.subr.mxu0 0.0
    %268 = vmatpush1.xpose.msra.mxu0 %v264
    %269 = vmatprep.subr.mxu0 0.0
    %270 = vmatpush1.xpose.msra.mxu0 %v265
    %271 = vmatprep.subr.mxu0 0.0
    %272 = vmatpush1.xpose.msra.mxu0 0.0
    %273 = vmatprep.subr.mxu0 0.0
    %274 = vmatpush1.xpose.msra.mxu0 0.0
    %275 = vmatprep.subr.mxu0 0.0
    %276 = vmatpush1.xpose.msra.mxu0 0.0
    %277 = vmatprep.subr.mxu0 0.0
    %278 = vmatpush1.xpose.msra.mxu0 0.0
    %279 = vmatprep.subr.mxu0 0.0
    %280 = vmatpush1.xpose.msra.mxu0 0.0
    %281 = vmatprep.subr.mxu0 0.0
    %282 = vmatpush1.xpose.msra.mxu0 0.0
    %283 = vmatprep.subr.mxu0 0.0
    %284 = vmatpush1.xpose.msra.mxu0 0.0
    %285 = vmatprep.subr.mxu0 0.0
    %286 = vmatpush1.xpose.msra.mxu0 0.0
    %287 = vmatprep.subr.mxu0 0.0
    %288 = vmatpush1.xpose.msra.mxu0 0.0
    %289 = vmatprep.subr.mxu0 0.0
    %290 = vmatpush1.xpose.msra.mxu0 0.0
    %291 = vmatprep.subr.mxu0 0.0
    %292 = vmatpush1.xpose.msra.mxu0 0.0
    %293 = vmatprep.subr.mxu0 0.0
    %294 = vmatpush1.xpose.msra.mxu0 0.0
    %295 = vmatprep.subr.mxu0 0.0
    %296 = vmatpush1.xpose.msra.mxu0 0.0
    %297 = vmatprep.subr.mxu0 0.0
    %298 = vmatpush1.xpose.msra.mxu0 0.0
    %299 = vmatprep.subr.mxu0 0.0
    %300 = vmatpush1.xpose.msra.mxu0 0.0
    %301 = vmatprep.subr.mxu0 0.0
    %302 = vmatpush1.xpose.msra.mxu0 0.0
    %303 = vmatprep.subr.mxu0 0.0
    %304 = vmatpush1.xpose.msra.mxu0 0.0
    %305 = vmatprep.subr.mxu0 0.0
    %306 = vmatpush1.xpose.msra.mxu0 0.0
    %307 = vmatprep.subr.mxu0 0.0
    %308 = vmatpush1.xpose.msra.mxu0 0.0
    %309 = vmatprep.subr.mxu0 0.0
    %310 = vmatpush1.xpose.msra.mxu0 0.0
    %311 = vmatprep.subr.mxu0 0.0
    %312 = vmatpush1.xpose.msra.mxu0 0.0
    %313 = vmatprep.subr.mxu0 0.0
    %314 = vmatpush1.xpose.msra.mxu0 0.0
    %315 = vmatprep.subr.mxu0 0.0
    %316 = vmatpush1.xpose.msra.mxu0 0.0
    %317 = vmatprep.subr.mxu0 0.0
    %318 = vmatpush1.xpose.msra.mxu0 0.0
    %319 = vmatprep.subr.mxu0 0.0
    %320 = vmatpush1.xpose.msra.mxu0 0.0
    %321 = vmatprep.subr.mxu0 0.0
    %322 = vmatpush1.xpose.msra.mxu0 0.0
    %323 = vmatprep.subr.mxu0 0.0
    %324 = vmatpush1.xpose.msra.mxu0 0.0
    %325 = vmatprep.subr.mxu0 0.0
    %326 = vmatpush1.xpose.msra.mxu0 0.0
    %327 = vmatprep.subr.mxu0 0.0
    %328 = vmatpush1.xpose.msra.mxu0 0.0
    %329 = vmatprep.subr.mxu0 0.0
    %330 = vmatpush1.xpose.msra.mxu0 0.0
    %331 = vmatprep.mubr.f32.mxu0 0.0
    %332 = vmatmul.mubr.f32.gmra.mrb[0].mxu0 %v266
    %v333 = vpop.f32.mrb[0].mxu0
    %v334 = vadd.f32 0.0, %v333
    %v335 = vpop.f32.mrb[0].mxu0
    %336 = vdwg.mxu0
    %vm337 = vcmask 122880
    %338 = vst.msk [vmem:[#allocation8] sm:$0x1] %vm337, %v334
    // Predicated region
    $region38: #{tpu_custom_call.1} parent=1 // pred_check
      _
    $region39: #{tpu_custom_call.1} parent=1 // pred_check_branch
      %340 = sbr.rel (0) target = $region41
    $region40: #{tpu_custom_call.1} parent=1 // pred_region
      %s342 = ssub.s32 16, 16
      %343 = vsyncadd [#allocation4], %s342
      %s345 = sshll.u32 [#allocation8], 4
      %s346 = int_to_ptr.vmem [resolvable:$true] %s345
      %348 = dma.vmem_to_hbm [thread:$0]  %s346, 16, %s6, [#allocation4]
    $region41: #{tpu_custom_call.1} parent=1 // pred_fallthru
      _
    // Predicated region
    $region42: #{tpu_custom_call.1} parent=1 // pred_check
      _
    $region43: #{tpu_custom_call.1} parent=1 // pred_check_branch
      %350 = sbr.rel (0) target = $region45
    $region44: #{tpu_custom_call.1} parent=1 // pred_region
      %351 = dma.done [#allocation4], 16
    $region45: #{tpu_custom_call.1} parent=1 // pred_fallthru
      _
    %352 = vsyncpa [#allocation3], 1
    %353 = vsyncpa [#allocation6], 1
    %354 = vsyncpa [#allocation4], 1

</llo_original>
